<compile_context>
chip_gen: v6e
topology: v6e:2x2x1
jax: 0.10.0
libtpu: 0.0.40
codegen_flags: <defaults>
</compile_context>

<pallas_src>
import functools
import numpy as np
import jax
import jax.numpy as jnp
from jax.experimental import pallas as pl
from jax.experimental.pallas import tpu as pltpu

BN_EPS = 1e-5


def _pair(v):
    return (v, v) if isinstance(v, int) else tuple(v)


def _round_up(v, m):
    return (v + m - 1) // m * m


# ---- pass-1 kernel: conv (one fused GEMM per image) + per-step BN partial stats ----
def _conv_stats_kernel(x_ref, w_ref, mask_ref, y_ref, stats_ref, *, offsets, nb):
    """One grid step processes Nb images.

    x_ref:     (Nb, Cin_pad, Lin)  bf16  padded + row-flattened images (zero tail so every
                                          shifted lane-view is in bounds)
    w_ref:     (Cout, K)           bf16  K = kh*kw*Cin_pad, tap-major / cin-minor packing
    mask_ref:  (1, Lout)           f32   1.0 at dense positions mapping to real outputs
    y_ref:     (Nb, Cout, Lout)    bf16  conv output, lane-dense extended-width layout
    stats_ref: (Cout, 2)           f32   per-step partials: [:,0]=sum(m*y), [:,1]=sum(m*y^2)
    """
    _, cout, lout = y_ref.shape
    w = w_ref[...]                                  # (Cout, K) bf16, loaded once per step
    m = mask_ref[...]                               # (1, Lout) f32
    s_acc = jnp.zeros((cout, 1), jnp.float32)
    ss_acc = jnp.zeros((cout, 1), jnp.float32)
    for i in range(nb):                             # static unroll; nb is small (<= 32)
        xi = x_ref[i]                               # (Cin_pad, Lin) bf16
        # Stack the kh*kw shifted lane-views along sublanes -> single K-dim MXU operand.
        # Each piece is a full bf16 sublane tile (Cin_pad % 16 == 0) -> aligned concat.
        xstack = jnp.concatenate([xi[:, off:off + lout] for off in offsets], axis=0)
        acc = jnp.dot(w, xstack, preferred_element_type=jnp.float32)   # (Cout, Lout) f32
        y_ref[i] = acc.astype(y_ref.dtype)          # bf16 writeback of the dominant array
        ym = acc * m                                # stats from the f32 accumulator
        s_acc = s_acc + jnp.sum(ym, axis=1, keepdims=True)
        ss_acc = ss_acc + jnp.sum(ym * acc, axis=1, keepdims=True)
    stats_ref[:, 0:1] = s_acc                       # one small store per grid step
    stats_ref[:, 1:2] = ss_acc


def basic_conv2d(x, weight, gamma, beta, *, stride=1, padding=0, dilation=1):
    """y = BatchNorm2d(conv2d(x, weight, bias=False)), train-mode batch statistics.

    x: (N, Cin, H, W) f32, weight: (Cout, Cin, kh, kw) f32, gamma/beta: (Cout,) f32.
    Returns (N, Cout, OH, OW) f32.
    """
    N, Cin, H, W = x.shape
    Cout, _, kh, kw = weight.shape
    sh, sw = _pair(stride)
    ph, pw = _pair(padding)
    dh, dw = _pair(dilation)

    Hp, Wp = H + 2 * ph, W + 2 * pw
    OH = (Hp - dh * (kh - 1) - 1) // sh + 1
    OW = (Wp - dw * (kw - 1) - 1) // sw + 1
    OH1 = Hp - dh * (kh - 1)                 # dense (stride-1) output rows over padded width
    Lout = OH1 * Wp
    Lin = _round_up(Hp * Wp + dw * (kw - 1), 128)
    Cin_pad = _round_up(Cin, 16)             # bf16-tile-aligned concat pieces in the kernel
    K = kh * kw * Cin_pad
    # TODO(synk): only the dense stride-1 output grid is computed; stride>1 configs waste
    # sh*sw x MXU work / HBM traffic (this module is used with stride=1).

    # ---- batch blocking: Nb images per grid step, sized against scoped VMEM ----
    per_img_vmem = Cin_pad * Lin * 2 + Cout * Lout * 2      # bf16 input tile + bf16 output tile
    budget = 6 * 1024 * 1024                                # double-buffered block budget (fits
    nb_cap = max(1, budget // (2 * per_img_vmem))           #  v5e's 16 MiB scoped with headroom)
    Nb = int(min(N, nb_cap, 32))                            # cap the static unroll length
    if N >= 2:
        Nb = min(Nb, (N + 1) // 2)                          # keep >= 2 grid steps (v7x: 2 TCs)
    G = -(-N // Nb)
    Np = G * Nb

    # ---- wrapper-side layout plumbing (no im2col): pad + flatten rows + bf16 cast ----
    xp = jnp.pad(x, ((0, Np - N), (0, Cin_pad - Cin), (ph, ph), (pw, pw)))  # (Np,Cin_pad,Hp,Wp)
    xflat = xp.reshape(Np, Cin_pad, Hp * Wp)
    xflat = jnp.pad(xflat, ((0, 0), (0, 0), (0, Lin - Hp * Wp))).astype(jnp.bfloat16)

    w = jnp.transpose(weight, (0, 2, 3, 1))                                 # (Cout, kh, kw, Cin)
    w = jnp.pad(w, ((0, 0), (0, 0), (0, 0), (0, Cin_pad - Cin)))
    w = w.reshape(Cout, K).astype(jnp.bfloat16)

    # validity mask over the dense extended grid (handles stride via subsample pattern)
    rows = np.arange(OH1)
    cols = np.arange(Wp)
    rv = (rows % sh == 0) & (rows < OH * sh)
    cv = (cols % sw == 0) & (cols < OW * sw)
    mask = jnp.asarray((rv[:, None] & cv[None, :]).reshape(1, Lout), dtype=jnp.float32)

    offsets = tuple(iy * dh * Wp + ix * dw for iy in range(kh) for ix in range(kw))
    kernel = functools.partial(_conv_stats_kernel, offsets=offsets, nb=Nb)

    # ---- pass 1: conv + per-step partial BN statistics (batched grid, pipelined) ----
    y_ext, stats = pl.pallas_call(
        kernel,
        out_shape=(jax.ShapeDtypeStruct((Np, Cout, Lout), jnp.bfloat16),
                   jax.ShapeDtypeStruct((G, Cout, 2), jnp.float32)),
        grid=(G,),
        in_specs=[
            pl.BlockSpec((Nb, Cin_pad, Lin), lambda g: (g, 0, 0)),
            pl.BlockSpec((Cout, K), lambda g: (0, 0)),
            pl.BlockSpec((1, Lout), lambda g: (0, 0)),
        ],
        out_specs=(
            pl.BlockSpec((Nb, Cout, Lout), lambda g: (g, 0, 0)),
            pl.BlockSpec((None, Cout, 2), lambda g: (g, 0, 0)),
        ),
        compiler_params=pltpu.CompilerParams(dimension_semantics=("parallel",)),
    )(xflat, w, mask)

    # ---- tiny XLA combine: global batch stats -> per-channel scale/shift (f32) ----
    # Padded batch entries are all-zero images -> zero conv output -> zero contribution,
    # so the real count N*OH*OW is correct.
    count = float(N * OH * OW)
    totals = jnp.sum(stats, axis=0)                          # (Cout, 2)
    mean = totals[:, 0] / count
    var = totals[:, 1] / count - mean * mean                 # biased (train-mode) variance
    inv = jax.lax.rsqrt(var + BN_EPS)
    scale = gamma * inv
    shift = beta - mean * scale
    # TODO(synk): PyTorch BatchNorm2d also updates running_mean/running_var (unbiased);
    # those buffer updates are not produced here (forward output only).

    # ---- BN affine fused (plain XLA) with the un-flatten / column-strip copy ----
    y = y_ext[:N].reshape(N, Cout, OH1, Wp)[:, :, 0:OH * sh:sh, 0:OW * sw:sw]
    out = y.astype(jnp.float32) * scale.reshape(1, Cout, 1, 1) + shift.reshape(1, Cout, 1, 1)
    return out


def _reference(x, weight, gamma, beta, stride, padding, dilation=1):
    y = jax.lax.conv_general_dilated(
        x, weight,
        window_strides=_pair(stride),
        padding=[(p, p) for p in _pair(padding)],
        rhs_dilation=_pair(dilation),
        dimension_numbers=("NCHW", "OIHW", "NCHW"),
        preferred_element_type=jnp.float32,
    )
    mean = y.mean(axis=(0, 2, 3), keepdims=True)
    var = ((y - mean) ** 2).mean(axis=(0, 2, 3), keepdims=True)
    yn = (y - mean) * jax.lax.rsqrt(var + BN_EPS)
    return yn * gamma.reshape(1, -1, 1, 1) + beta.reshape(1, -1, 1, 1)


if __name__ == "__main__":
    key = jax.random.PRNGKey(0)
    k_x, k_w, k_g, k_b = jax.random.split(key, 4)

    # BasicConv2d(in_planes=4, out_planes=8, kernel_size=3, stride=1, padding=1)
    in_planes, out_planes, ksize, stride, padding = 4, 8, 3, 1, 1
    N, H, W = 2, 16, 16

    x = jax.random.normal(k_x, (N, in_planes, H, W), dtype=jnp.float32)
    fan_in = in_planes * ksize * ksize
    weight = jax.random.normal(k_w, (out_planes, in_planes, ksize, ksize),
                               dtype=jnp.float32) * (1.0 / np.sqrt(fan_in))
    gamma = 1.0 + 0.1 * jax.random.normal(k_g, (out_planes,), dtype=jnp.float32)
    beta = 0.1 * jax.random.normal(k_b, (out_planes,), dtype=jnp.float32)

    fwd = jax.jit(functools.partial(basic_conv2d, stride=stride, padding=padding))
    out = jax.block_until_ready(fwd(x, weight, gamma, beta))

    ref = jax.block_until_ready(_reference(x, weight, gamma, beta, stride, padding))
    assert out.shape == (N, out_planes, H, W), out.shape
    # bf16 MXU inputs + bf16 intermediate with f32 accumulation / f32 statistics
    # -> loose-but-meaningful tolerance
    np.testing.assert_allclose(np.asarray(out), np.asarray(ref), atol=4e-2, rtol=4e-2)

    print("KERNEL_OK")
</pallas_src>

<mosaic_0001>
module attributes {stable_mosaic.version = 11 : i64} {
  func.func @_conv_stats_kernel(%arg0: i32, %arg1: memref<1x16x384xbf16, #tpu.memory_space<vmem>>, %arg2: memref<8x144xbf16, #tpu.memory_space<vmem>>, %arg3: memref<1x288xf32, #tpu.memory_space<vmem>>, %arg4: memref<1x8x288xbf16, #tpu.memory_space<vmem>>, %arg5: memref<1x8x2xf32, #tpu.memory_space<vmem>>) attributes {dimension_semantics = [#tpu.dimension_semantics<parallel>], iteration_bounds = array<i64: 2>, scalar_prefetch = 0 : i64, scratch_operands = 0 : i64, tpu.core_type = #tpu.core_type<tc>, window_params = [{transform_indices = @transform_0, window_bounds = array<i64: 1, 16, 384>}, {pipeline_mode = #tpu.pipeline_mode<synchronous>, transform_indices = @transform_1, window_bounds = array<i64: 8, 144>}, {pipeline_mode = #tpu.pipeline_mode<synchronous>, transform_indices = @transform_2, window_bounds = array<i64: 1, 288>}, {transform_indices = @transform_3, window_bounds = array<i64: 1, 8, 288>}, {transform_indices = @transform_4, window_bounds = array<i64: 1, 8, 2>}]} {
    %c0 = arith.constant 0 : index
    %c0_0 = arith.constant 0 : index
    %0 = vector.load %arg2[%c0, %c0_0] : memref<8x144xbf16, #tpu.memory_space<vmem>>, vector<8x144xbf16>
    %c0_1 = arith.constant 0 : index
    %c0_2 = arith.constant 0 : index
    %1 = vector.load %arg3[%c0_1, %c0_2] : memref<1x288xf32, #tpu.memory_space<vmem>>, vector<1x288xf32>
    %cst = arith.constant 0.000000e+00 : f32
    %2 = vector.broadcast %cst : f32 to vector<8x1xf32>
    %cst_3 = arith.constant 0.000000e+00 : f32
    %3 = vector.broadcast %cst_3 : f32 to vector<8x1xf32>
    %c0_4 = arith.constant 0 : index
    %c0_5 = arith.constant 0 : index
    %c0_6 = arith.constant 0 : index
    %4 = vector.load %arg1[%c0_4, %c0_5, %c0_6] : memref<1x16x384xbf16, #tpu.memory_space<vmem>>, vector<1x16x384xbf16>
    %5 = vector.shape_cast %4 : vector<1x16x384xbf16> to vector<16x384xbf16>
    %6 = vector.extract_strided_slice %5 {offsets = [0, 0], sizes = [16, 288], strides = [1, 1]} : vector<16x384xbf16> to vector<16x288xbf16>
    %7 = vector.extract_strided_slice %5 {offsets = [0, 1], sizes = [16, 288], strides = [1, 1]} : vector<16x384xbf16> to vector<16x288xbf16>
    %8 = vector.extract_strided_slice %5 {offsets = [0, 2], sizes = [16, 288], strides = [1, 1]} : vector<16x384xbf16> to vector<16x288xbf16>
    %9 = vector.extract_strided_slice %5 {offsets = [0, 18], sizes = [16, 288], strides = [1, 1]} : vector<16x384xbf16> to vector<16x288xbf16>
    %10 = vector.extract_strided_slice %5 {offsets = [0, 19], sizes = [16, 288], strides = [1, 1]} : vector<16x384xbf16> to vector<16x288xbf16>
    %11 = vector.extract_strided_slice %5 {offsets = [0, 20], sizes = [16, 288], strides = [1, 1]} : vector<16x384xbf16> to vector<16x288xbf16>
    %12 = vector.extract_strided_slice %5 {offsets = [0, 36], sizes = [16, 288], strides = [1, 1]} : vector<16x384xbf16> to vector<16x288xbf16>
    %13 = vector.extract_strided_slice %5 {offsets = [0, 37], sizes = [16, 288], strides = [1, 1]} : vector<16x384xbf16> to vector<16x288xbf16>
    %14 = vector.extract_strided_slice %5 {offsets = [0, 38], sizes = [16, 288], strides = [1, 1]} : vector<16x384xbf16> to vector<16x288xbf16>
    %15 = tpu.concatenate %6, %7, %8, %9, %10, %11, %12, %13, %14 in 0 : vector<16x288xbf16>, vector<16x288xbf16>, vector<16x288xbf16>, vector<16x288xbf16>, vector<16x288xbf16>, vector<16x288xbf16>, vector<16x288xbf16>, vector<16x288xbf16>, vector<16x288xbf16> -> vector<144x288xbf16>
    %cst_7 = arith.constant dense<0.000000e+00> : vector<8x288xf32>
    %16 = tpu.matmul %0, %15, %cst_7 {dimension_numbers = #tpu.dot_dimension_numbers<[1], [0], [0], [1], [0, 0, 1, 1], [], []>} : vector<8x144xbf16>, vector<144x288xbf16>, vector<8x288xf32> -> vector<8x288xf32>
    %17 = arith.truncf %16 : vector<8x288xf32> to vector<8x288xbf16>
    %c0_8 = arith.constant 0 : index
    %c0_9 = arith.constant 0 : index
    %c0_10 = arith.constant 0 : index
    %18 = vector.load %arg4[%c0_8, %c0_9, %c0_10] : memref<1x8x288xbf16, #tpu.memory_space<vmem>>, vector<1x8x288xbf16>
    %19 = vector.shape_cast %18 : vector<1x8x288xbf16> to vector<8x288xbf16>
    %20 = vector.shape_cast %17 : vector<8x288xbf16> to vector<1x8x288xbf16>
    tpu.vector_store %arg4[%c0_8, %c0_9, %c0_10], %20 {strides = array<i32>} : memref<1x8x288xbf16, #tpu.memory_space<vmem>>, vector<1x8x288xbf16>,
    %21 = vector.broadcast %1 : vector<1x288xf32> to vector<8x288xf32>
    %22 = arith.mulf %16, %21 : vector<8x288xf32>
    %cst_11 = arith.constant dense<0.000000e+00> : vector<8xf32>
    %23 = vector.multi_reduction <add>, %22, %cst_11 [1] : vector<8x288xf32> to vector<8xf32>
    %24 = vector.shape_cast %23 : vector<8xf32> to vector<8x1xf32>
    %25 = arith.addf %2, %24 : vector<8x1xf32>
    %26 = arith.mulf %22, %16 : vector<8x288xf32>
    %cst_12 = arith.constant dense<0.000000e+00> : vector<8xf32>
    %27 = vector.multi_reduction <add>, %26, %cst_12 [1] : vector<8x288xf32> to vector<8xf32>
    %28 = vector.shape_cast %27 : vector<8xf32> to vector<8x1xf32>
    %29 = arith.addf %3, %28 : vector<8x1xf32>
    %c0_13 = arith.constant 0 : index
    %c0_14 = arith.constant 0 : index
    %c0_15 = arith.constant 0 : index
    %30 = vector.load %arg5[%c0_13, %c0_14, %c0_15] : memref<1x8x2xf32, #tpu.memory_space<vmem>>, vector<1x8x1xf32>
    %31 = vector.shape_cast %30 : vector<1x8x1xf32> to vector<8x1xf32>
    %32 = vector.shape_cast %25 : vector<8x1xf32> to vector<1x8x1xf32>
    tpu.vector_store %arg5[%c0_13, %c0_14, %c0_15], %32 {strides = array<i32>} : memref<1x8x2xf32, #tpu.memory_space<vmem>>, vector<1x8x1xf32>,
    %c0_16 = arith.constant 0 : index
    %c0_17 = arith.constant 0 : index
    %c1 = arith.constant 1 : index
    %33 = vector.load %arg5[%c0_16, %c0_17, %c1] : memref<1x8x2xf32, #tpu.memory_space<vmem>>, vector<1x8x1xf32>
    %34 = vector.shape_cast %33 : vector<1x8x1xf32> to vector<8x1xf32>
    %35 = vector.shape_cast %29 : vector<8x1xf32> to vector<1x8x1xf32>
    tpu.vector_store %arg5[%c0_16, %c0_17, %c1], %35 {strides = array<i32>} : memref<1x8x2xf32, #tpu.memory_space<vmem>>, vector<1x8x1xf32>,
    return
  }
  func.func @transform_0(%arg0: i32) -> (i32, i32, i32) {
    %c0_i32 = arith.constant 0 : i32
    %c0_i32_0 = arith.constant 0 : i32
    %c0_i32_1 = arith.constant 0 : i32
    return %arg0, %c0_i32, %c0_i32_0 : i32, i32, i32
  }
  func.func @transform_1(%arg0: i32) -> (i32, i32) {
    %c0_i32 = arith.constant 0 : i32
    %c0_i32_0 = arith.constant 0 : i32
    %c0_i32_1 = arith.constant 0 : i32
    return %c0_i32, %c0_i32_0 : i32, i32
  }
  func.func @transform_2(%arg0: i32) -> (i32, i32) {
    %c0_i32 = arith.constant 0 : i32
    %c0_i32_0 = arith.constant 0 : i32
    %c0_i32_1 = arith.constant 0 : i32
    return %c0_i32, %c0_i32_0 : i32, i32
  }
  func.func @transform_3(%arg0: i32) -> (i32, i32, i32) {
    %c0_i32 = arith.constant 0 : i32
    %c0_i32_0 = arith.constant 0 : i32
    %c0_i32_1 = arith.constant 0 : i32
    return %arg0, %c0_i32, %c0_i32_0 : i32, i32, i32
  }
  func.func @transform_4(%arg0: i32) -> (i32, i32, i32) {
    %c0_i32 = arith.constant 0 : i32
    %c0_i32_0 = arith.constant 0 : i32
    %c0_i32_1 = arith.constant 0 : i32
    return %arg0, %c0_i32, %c0_i32_0 : i32, i32, i32
  }
}

</mosaic_0001>

<llo_original>
// kernel: basic_conv2d.1
$region0: #{basic_conv2d.1}
  #allocation0 [shape = 'u32[]', space=smem, size = 0x4, offset = 0x4, fixed_abs, tag = 'smem constant byte address 0x4 - core index']
  #allocation1 [shape = 'u32[144,128]{1,0:T(1,128)}', space=vmem, size = 0x12000, scoped, tag = 'internal scratch']
  %s0 = inlined_call_operand.vmem [shape: bf16[2,16,384], index: 0, kind: input, shape index: {}]
  %s1 = inlined_call_operand.vmem [shape: bf16[8,144], index: 1, kind: input, shape index: {}]
  %s2 = inlined_call_operand.vmem [shape: f32[1,288], index: 2, kind: input, shape index: {}]
  %s3 = inlined_call_operand.vmem [shape: bf16[2,8,288], index: 3, kind: output, shape index: {0}]
  %s4 = inlined_call_operand.vmem [shape: f32[2,8,2], index: 4, kind: output, shape index: {1}]
  %5 = xla_tuple %s3, %s4
  %s6 = sld [smem:[#allocation0]]
  $region53: #{basic_conv2d.1} parent=0
    _
  %s8 = ssub.s32 1, %s6
  %s9 = scalar_select 0, %s8, %s6
  loop: start=0, step=1, limit=4
  $region2: #{basic_conv2d.1} parent=0 // loop_pre_header
    _
  $region3: #{basic_conv2d.1} parent=0 // loop_header
    %s11 = sphi 0, %s15
    %p12 = scmp.ge.s32.totalorder %s11, 4
    %s21 = sphi 0, %s23
    %s24 = sphi 0, %s21
    %s25 = sphi 0, %s24
    %s41 = sphi 0, %s25
    %s45 = sphi 0, %s45
    %s47 = sphi 0, %s45
    %s48 = sphi 0, %s47
    %s62 = sphi 0, %s48
    %s66 = sphi 0, %s66
    %s68 = sphi 0, %s66
    %s69 = sphi 0, %s68
    %s83 = sphi 0, %s69
    %s89 = sphi 0, %s91
    %s92 = sphi 0, %s89
    %s93 = sphi 0, %s92
    %s109 = sphi 0, %s93
    %s115 = sphi 0, %s117
    %s118 = sphi 0, %s115
    %s119 = sphi 0, %s118
    %s135 = sphi 0, %s119
  $region4: #{basic_conv2d.1} parent=0 // loop_header_branch
    %14 = sbr.rel (%p12) target = $region8
  $region5: #{basic_conv2d.1} parent=0 // loop_body
    %s16 = ssub.s32 %s11, 1
    %s17 = ssub.s32 %s11, 2
    %s18 = sadd.s32 %s11, 1
    %s19 = ssub.s32 %s11, %s18
    %p20 = scmp.eq.s32.totalorder %s19, 0
    %s22 = sadd.s32 %s21, 1
    %s23 = scalar_select %p20, %s21, %s22
    %p26 = pneg %p20
    %p27 = scmp.eq.s32.totalorder %s11, 1
    %p28 = por %p26, %p27
    %p29 = scmp.ne.s32.totalorder %s21, %s24
    %p30 = scmp.eq.s32.totalorder %s11, 0
    %p31 = por %p29, %p30
    %p32 = scmp.ne.s32.totalorder %s21, %s24
    %p33 = scmp.eq.s32.totalorder %s16, 1
    %p34 = por %p32, %p33
    %p35 = scmp.ne.s32.totalorder %s24, %s25
    %p36 = scmp.eq.s32.totalorder %s16, 0
    %p37 = por %p35, %p36
    %p38 = scmp.ne.s32.totalorder %s24, %s25
    %p39 = scmp.eq.s32.totalorder %s17, 1
    %p40 = por %p38, %p39
    %p42 = scmp.ne.s32.totalorder %s25, %s41
    %p43 = scmp.eq.s32.totalorder %s17, 0
    %p44 = por %p42, %p43
    %s46 = sadd.s32 %s45, 1
    %p49 = scmp.eq.s32.totalorder %s11, 1
    %p50 = scmp.ne.s32.totalorder %s45, %s47
    %p51 = scmp.eq.s32.totalorder %s11, 0
    %p52 = por %p50, %p51
    %p53 = scmp.ne.s32.totalorder %s45, %s47
    %p54 = scmp.eq.s32.totalorder %s16, 1
    %p55 = por %p53, %p54
    %p56 = scmp.ne.s32.totalorder %s47, %s48
    %p57 = scmp.eq.s32.totalorder %s16, 0
    %p58 = por %p56, %p57
    %p59 = scmp.ne.s32.totalorder %s47, %s48
    %p60 = scmp.eq.s32.totalorder %s17, 1
    %p61 = por %p59, %p60
    %p63 = scmp.ne.s32.totalorder %s48, %s62
    %p64 = scmp.eq.s32.totalorder %s17, 0
    %p65 = por %p63, %p64
    %s67 = sadd.s32 %s66, 1
    %p70 = scmp.eq.s32.totalorder %s11, 1
    %p71 = scmp.ne.s32.totalorder %s66, %s68
    %p72 = scmp.eq.s32.totalorder %s11, 0
    %p73 = por %p71, %p72
    %p74 = scmp.ne.s32.totalorder %s66, %s68
    %p75 = scmp.eq.s32.totalorder %s16, 1
    %p76 = por %p74, %p75
    %p77 = scmp.ne.s32.totalorder %s68, %s69
    %p78 = scmp.eq.s32.totalorder %s16, 0
    %p79 = por %p77, %p78
    %p80 = scmp.ne.s32.totalorder %s68, %s69
    %p81 = scmp.eq.s32.totalorder %s17, 1
    %p82 = por %p80, %p81
    %p84 = scmp.ne.s32.totalorder %s69, %s83
    %p85 = scmp.eq.s32.totalorder %s17, 0
    %p86 = por %p84, %p85
    %s87 = ssub.s32 %s11, %s18
    %p88 = scmp.eq.s32.totalorder %s87, 0
    %s90 = sadd.s32 %s89, 1
    %s91 = scalar_select %p88, %s89, %s90
    %p94 = pneg %p88
    %p95 = scmp.eq.s32.totalorder %s11, 1
    %p96 = por %p94, %p95
    %p97 = scmp.ne.s32.totalorder %s89, %s92
    %p98 = scmp.eq.s32.totalorder %s11, 0
    %p99 = por %p97, %p98
    %p100 = scmp.ne.s32.totalorder %s89, %s92
    %p101 = scmp.eq.s32.totalorder %s16, 1
    %p102 = por %p100, %p101
    %p103 = scmp.ne.s32.totalorder %s92, %s93
    %p104 = scmp.eq.s32.totalorder %s16, 0
    %p105 = por %p103, %p104
    %p106 = scmp.ne.s32.totalorder %s92, %s93
    %p107 = scmp.eq.s32.totalorder %s17, 1
    %p108 = por %p106, %p107
    %p110 = scmp.ne.s32.totalorder %s93, %s109
    %p111 = scmp.eq.s32.totalorder %s17, 0
    %p112 = por %p110, %p111
    %s113 = ssub.s32 %s11, %s18
    %p114 = scmp.eq.s32.totalorder %s113, 0
    %s116 = sadd.s32 %s115, 1
    %s117 = scalar_select %p114, %s115, %s116
    %p120 = pneg %p114
    %p121 = scmp.eq.s32.totalorder %s11, 1
    %p122 = por %p120, %p121
    %p123 = scmp.ne.s32.totalorder %s115, %s118
    %p124 = scmp.eq.s32.totalorder %s11, 0
    %p125 = por %p123, %p124
    %p126 = scmp.ne.s32.totalorder %s115, %s118
    %p127 = scmp.eq.s32.totalorder %s16, 1
    %p128 = por %p126, %p127
    %p129 = scmp.ne.s32.totalorder %s118, %s119
    %p130 = scmp.eq.s32.totalorder %s16, 0
    %p131 = por %p129, %p130
    %p132 = scmp.ne.s32.totalorder %s118, %s119
    %p133 = scmp.eq.s32.totalorder %s17, 1
    %p134 = por %p132, %p133
    %p136 = scmp.ne.s32.totalorder %s119, %s135
    %p137 = scmp.eq.s32.totalorder %s17, 0
    %p138 = por %p136, %p137
    %p139 = scmp.le.s32.totalorder 1, %s11
    %p140 = scmp.lt.s32.totalorder %s11, 3
    %p141 = pnand %p139, %p140
    %p142 = pneg %p141
    // Predicated region
    $region9: #{basic_conv2d.1} parent=5 // pred_check
      _
    $region10: #{basic_conv2d.1} parent=5 // pred_check_branch
      %144 = sbr.rel (%p141) target = $region12
    $region11: #{basic_conv2d.1} parent=5 // pred_region
      %s145 = ssub.s32 %s11, 1
      // Predicated region
      $region13: #{basic_conv2d.1} parent=11 // pred_check
        %p146 = pneg %p58
      $region14: #{basic_conv2d.1} parent=11 // pred_check_branch
        %148 = sbr.rel (%p146) target = $region16
      $region15: #{basic_conv2d.1} parent=11 // pred_region
        _
      $region16: #{basic_conv2d.1} parent=11 // pred_fallthru
        _
      // Predicated region
      $region17: #{basic_conv2d.1} parent=11 // pred_check
        %p149 = pneg %p79
      $region18: #{basic_conv2d.1} parent=11 // pred_check_branch
        %151 = sbr.rel (%p149) target = $region20
      $region19: #{basic_conv2d.1} parent=11 // pred_region
        _
      $region20: #{basic_conv2d.1} parent=11 // pred_fallthru
        _
    $region12: #{basic_conv2d.1} parent=5 // pred_fallthru
      _
    %p152 = scmp.lt.s32.totalorder %s11, 2
    // Predicated region
    $region21: #{basic_conv2d.1} parent=5 // pred_check
      %p153 = pneg %p152
    $region22: #{basic_conv2d.1} parent=5 // pred_check_branch
      %155 = sbr.rel (%p153) target = $region24
    $region23: #{basic_conv2d.1} parent=5 // pred_region
      // Predicated region
      $region25: #{basic_conv2d.1} parent=23 // pred_check
        %p156 = pneg %p31
      $region26: #{basic_conv2d.1} parent=23 // pred_check_branch
        %158 = sbr.rel (%p156) target = $region28
      $region27: #{basic_conv2d.1} parent=23 // pred_region
        %p159 = scmp.lt.s32.totalorder %s11, 1
        %s160 = scalar_select %p159, %s11, 1
        %s161 = smul.addr %s160, 6
        %s162 = smul.addr %s161, 4
        %s163 = scalar_lea.vmem %s0, %s162
      $region28: #{basic_conv2d.1} parent=23 // pred_fallthru
        _
    $region24: #{basic_conv2d.1} parent=5 // pred_fallthru
      _
    %p164 = scmp.le.s32.totalorder 1, %s11
    %p165 = scmp.lt.s32.totalorder %s11, 3
    %p166 = pnand %p164, %p165
    %p167 = pneg %p166
    // Predicated region
    $region29: #{basic_conv2d.1} parent=5 // pred_check
      _
    $region30: #{basic_conv2d.1} parent=5 // pred_check_branch
      %169 = sbr.rel (%p166) target = $region32
    $region31: #{basic_conv2d.1} parent=5 // pred_region
      %s170 = ssub.s32 %s11, 1
      %p171 = scmp.lt.s32.totalorder %s16, 1
      %s172 = scalar_select %p171, %s16, 1
      %s173 = smul.addr %s172, 6
      %s174 = smul.addr %s173, 4
      %s175 = scalar_lea.vmem %s0, %s174
      %p176 = pneg %p37
      %p177 = pneg %p34
      %p178 = pneg %p58
      %p179 = pneg %p55
      %p180 = pneg %p79
      %p181 = pneg %p76
      %p182 = pneg %p105
      %p183 = pneg %p102
      %p184 = scmp.lt.s32.totalorder %s16, 1
      %s185 = scalar_select %p184, %s16, 1
      %s186 = smul.addr %s185, 3
      %s187 = smul.addr %s186, 4
      %s188 = scalar_lea.vmem %s3, %s187
      %p189 = pneg %p131
      %p190 = pneg %p128
      %p191 = scmp.lt.s32.totalorder %s16, 1
      %s192 = scalar_select %p191, %s16, 1
      %s193 = smul.addr %s192, 8
      %s194 = scalar_lea.vmem %s4, %s193
      %p195 = scmp.lt.s32.totalorder %s16, 1
      %s196 = scalar_select %p195, %s16, 1
      %s197 = smul.addr %s196, 6
      %s198 = smul.addr %s197, 4
      %s199 = scalar_lea.vmem %s0, %s198
      %p200 = scmp.lt.s32.totalorder %s16, 1
      %s201 = scalar_select %p200, %s16, 1
      %s202 = smul.addr %s201, 3
      %s203 = smul.addr %s202, 4
      %s204 = scalar_lea.vmem %s3, %s203
      %p205 = scmp.lt.s32.totalorder %s16, 1
      %s206 = scalar_select %p205, %s16, 1
      %s207 = smul.addr %s206, 8
      %s208 = scalar_lea.vmem %s4, %s207
      %v210 = vld [vmem:[%s1] sm:$0xff]
      %v211 = vld [vmem:[%s2] sm:$0x7]
      %v212 = vld [vmem:[%s199] sm:$0xff]
      %v213 = vld [vmem:[%s199 + $0x8] sm:$0xf]
      %v214 = vld [vmem:[%s199 + $0xc] sm:$0xff]
      %v215 = vld [vmem:[%s199 + $0x14] sm:$0xf]
      %v220 = vunpack.c.l.b16 %v212
      %v221 = vunpack.c.h.b16 %v212
      %v222 = vunpack.c.l.b16 %v213
      %v223 = vunpack.c.l.b16 %v214
      %v224 = vunpack.c.h.b16 %v214
      %v225 = vunpack.c.l.b16 %v215
      %v226 = vpack.c.b16 %v223, %v220
      %v227 = vpack.c.b16 %v224, %v221
      %v228 = vpack.c.b16 %v225, %v222
      %232 = vrot.lane.b32.xlu0 %v226, 127
      %v233 = vpop.permute.xlu0 %232
      %234 = vrot.lane.b32.xlu0 %v227, 127
      %v235 = vpop.permute.xlu0 %234
      %236 = vrot.lane.b32.xlu0 %v228, 127
      %v237 = vpop.permute.xlu0 %236
      %vm238 = vcmask 1039360
      %v239 = vsel %vm238, %v233, %v235
      %v240 = vsel %vm238, %v235, %v237
      %244 = vrot.lane.b32.xlu0 %v226, 126
      %v245 = vpop.permute.xlu0 %244
      %246 = vrot.lane.b32.xlu0 %v227, 126
      %v247 = vpop.permute.xlu0 %246
      %248 = vrot.lane.b32.xlu0 %v228, 126
      %v249 = vpop.permute.xlu0 %248
      %vm250 = vcmask 1031168
      %v251 = vsel %vm250, %v245, %v247
      %v252 = vsel %vm250, %v247, %v249
      %256 = vrot.lane.b32.xlu0 %v226, 110
      %v257 = vpop.permute.xlu0 %256
      %258 = vrot.lane.b32.xlu0 %v227, 110
      %v259 = vpop.permute.xlu0 %258
      %260 = vrot.lane.b32.xlu0 %v228, 110
      %v261 = vpop.permute.xlu0 %260
      %vm262 = vcmask 900096
      %v263 = vsel %vm262, %v257, %v259
      %v264 = vsel %vm262, %v259, %v261
      %268 = vrot.lane.b32.xlu0 %v226, 109
      %v269 = vpop.permute.xlu0 %268
      %270 = vrot.lane.b32.xlu0 %v227, 109
      %v271 = vpop.permute.xlu0 %270
      %272 = vrot.lane.b32.xlu0 %v228, 109
      %v273 = vpop.permute.xlu0 %272
      %vm274 = vcmask 891904
      %v275 = vsel %vm274, %v269, %v271
      %v276 = vsel %vm274, %v271, %v273
      %280 = vrot.lane.b32.xlu0 %v226, 108
      %v281 = vpop.permute.xlu0 %280
      %282 = vrot.lane.b32.xlu0 %v227, 108
      %v283 = vpop.permute.xlu0 %282
      %284 = vrot.lane.b32.xlu0 %v228, 108
      %v285 = vpop.permute.xlu0 %284
      %vm286 = vcmask 883712
      %v287 = vsel %vm286, %v281, %v283
      %v288 = vsel %vm286, %v283, %v285
      %292 = vrot.lane.b32.xlu0 %v226, 92
      %v293 = vpop.permute.xlu0 %292
      %294 = vrot.lane.b32.xlu0 %v227, 92
      %v295 = vpop.permute.xlu0 %294
      %296 = vrot.lane.b32.xlu0 %v228, 92
      %v297 = vpop.permute.xlu0 %296
      %vm298 = vcmask 752640
      %v299 = vsel %vm298, %v293, %v295
      %v300 = vsel %vm298, %v295, %v297
      %304 = vrot.lane.b32.xlu0 %v226, 91
      %v305 = vpop.permute.xlu0 %304
      %306 = vrot.lane.b32.xlu0 %v227, 91
      %v307 = vpop.permute.xlu0 %306
      %308 = vrot.lane.b32.xlu0 %v228, 91
      %v309 = vpop.permute.xlu0 %308
      %vm310 = vcmask 744448
      %v311 = vsel %vm310, %v305, %v307
      %v312 = vsel %vm310, %v307, %v309
      %316 = vrot.lane.b32.xlu0 %v226, 90
      %v317 = vpop.permute.xlu0 %316
      %318 = vrot.lane.b32.xlu0 %v227, 90
      %v319 = vpop.permute.xlu0 %318
      %320 = vrot.lane.b32.xlu0 %v228, 90
      %v321 = vpop.permute.xlu0 %320
      %vm322 = vcmask 736256
      %v323 = vsel %vm322, %v317, %v319
      %v324 = vsel %vm322, %v319, %v321
      %v329 = vunpack.c.l.b16 %v210
      %v330 = vunpack.c.h.b16 %v210
      %v331 = vpack.c.b16 %v329, %v329
      %v332 = vpack.c.b16 %v330, %v330
      %vm334 = vcmask 130048
      %v336 = vsel %vm334, %v332, 0
      %338 = vmatprep.subr.bf16.mxu0 %v312
      %339 = vmatpush1.bf16.msra.mxu0 %v311
      %340 = vmatprep.subr.bf16.mxu0 %v300
      %341 = vmatpush1.bf16.msra.mxu0 %v299
      %342 = vmatprep.subr.bf16.mxu0 %v288
      %343 = vmatpush1.bf16.msra.mxu0 %v287
      %344 = vmatprep.subr.bf16.mxu0 %v276
      %345 = vmatpush1.bf16.msra.mxu0 %v275
      %346 = vmatprep.subr.bf16.mxu0 %v264
      %347 = vmatpush1.bf16.msra.mxu0 %v263
      %348 = vmatprep.subr.bf16.mxu0 %v252
      %349 = vmatpush1.bf16.msra.mxu0 %v251
      %350 = vmatprep.subr.bf16.mxu0 %v240
      %351 = vmatpush1.bf16.msra.mxu0 %v239
      %352 = vmatprep.subr.bf16.mxu0 %v227
      %353 = vmatpush1.bf16.msra.mxu0 %v226
      %354 = vmatprep.subr.bf16.mxu0 0
      %355 = vmatpush2.bf16.msra.mxu0 0
      %356 = vmatprep.subr.bf16.mxu0 0
      %357 = vmatpush2.bf16.msra.mxu0 0
      %358 = vmatprep.subr.bf16.mxu0 0
      %359 = vmatpush2.bf16.msra.mxu0 0
      %360 = vmatprep.subr.bf16.mxu0 0
      %361 = vmatpush2.bf16.msra.mxu0 0
      %362 = vmatprep.subr.bf16.mxu0 0
      %363 = vmatpush2.bf16.msra.mxu0 0
      %364 = vmatprep.subr.bf16.mxu0 0
      %365 = vmatpush2.bf16.msra.mxu0 0
      %366 = vmatprep.subr.bf16.mxu0 0
      %367 = vmatpush2.bf16.msra.mxu0 0
      %368 = vmatprep.subr.bf16.mxu0 %v324
      %369 = vmatpush2.bf16.msra.mxu0 %v323
      %370 = vmatprep.mubr.bf16.mxu0 %v336
      %371 = vmatmul.mubr.bf16.gmra.mxu0 %v331
      %v372 = vpop.f32.mrf.mxu0
      %v373 = vadd.f32 0.0, %v372
      %v374 = vpop.f32.mrf.mxu0
      %v375 = vadd.f32 0.0, %v374
      %v376 = vpop.f32.mrf.mxu0
      %v377 = vpop.f32.mrf.mxu0
      %378 = vdwg.mxu0
      %379 = vmatprep.subr.bf16.mxu0 0
      %380 = vmatpush1.bf16.msra.mxu0 %v309
      %381 = vmatprep.subr.bf16.mxu0 0
      %382 = vmatpush1.bf16.msra.mxu0 %v297
      %383 = vmatprep.subr.bf16.mxu0 0
      %384 = vmatpush1.bf16.msra.mxu0 %v285
      %385 = vmatprep.subr.bf16.mxu0 0
      %386 = vmatpush1.bf16.msra.mxu0 %v273
      %387 = vmatprep.subr.bf16.mxu0 0
      %388 = vmatpush1.bf16.msra.mxu0 %v261
      %389 = vmatprep.subr.bf16.mxu0 0
      %390 = vmatpush1.bf16.msra.mxu0 %v249
      %391 = vmatprep.subr.bf16.mxu0 0
      %392 = vmatpush1.bf16.msra.mxu0 %v237
      %393 = vmatprep.subr.bf16.mxu0 0
      %394 = vmatpush1.bf16.msra.mxu0 %v228
      %395 = vmatprep.subr.bf16.mxu0 0
      %396 = vmatpush2.bf16.msra.mxu0 0
      %397 = vmatprep.subr.bf16.mxu0 0
      %398 = vmatpush2.bf16.msra.mxu0 0
      %399 = vmatprep.subr.bf16.mxu0 0
      %400 = vmatpush2.bf16.msra.mxu0 0
      %401 = vmatprep.subr.bf16.mxu0 0
      %402 = vmatpush2.bf16.msra.mxu0 0
      %403 = vmatprep.subr.bf16.mxu0 0
      %404 = vmatpush2.bf16.msra.mxu0 0
      %405 = vmatprep.subr.bf16.mxu0 0
      %406 = vmatpush2.bf16.msra.mxu0 0
      %407 = vmatprep.subr.bf16.mxu0 0
      %408 = vmatpush2.bf16.msra.mxu0 0
      %409 = vmatprep.subr.bf16.mxu0 0
      %410 = vmatpush2.bf16.msra.mxu0 %v321
      %411 = vmatprep.mubr.bf16.mxu0 %v336
      %412 = vmatmul.mubr.bf16.gmra.mxu0 %v331
      %v413 = vpop.f32.mrf.mxu0
      %v414 = vadd.f32 0.0, %v413
      %v415 = vpop.f32.mrf.mxu0
      %v416 = vpop.f32.mrf.mxu0
      %v417 = vpop.f32.mrf.mxu0
      %418 = vdwg.mxu0
      %v419 = vpack.c.bf16 %v373, %v373
      %v420 = vpack.c.bf16 %v375, %v375
      %v421 = vpack.c.bf16 %v414, %v414
      %v425 = vunpack.c.l.b16 %v419
      %v426 = vunpack.c.l.b16 %v420
      %v427 = vunpack.c.l.b16 %v421
      %v428 = vpack.c.b16 %v426, %v425
      %v429 = vpack.c.b16 %v427, %v427
      %432 = vst [vmem:[%s204] sm:$0xff] %v428
      %vm433 = vcmask 257024
      %434 = vst.msk [vmem:[%s204 + $0x8] sm:$0xf] %vm433, %v429
      %v436 = vlaneseq
      %v437 = vshrl.u32 %v436, 7
      %v438 = vsub.s32 0, %v437
      %v439 = vrot.slane %v211, %v438
      %v440 = vlaneseq
      %v441 = vshrl.u32 %v440, 7
      %v442 = vsub.s32 1, %v441
      %v443 = vrot.slane %v211, %v442
      %v444 = vlaneseq
      %v445 = vshrl.u32 %v444, 7
      %v446 = vsub.s32 2, %v445
      %v447 = vrot.slane %v211, %v446
      %v451 = vmul.f32 %v373, %v439
      %v452 = vmul.f32 %v375, %v443
      %v453 = vmul.f32 %v414, %v447
      %v454 = vadd.f32 %v451, %v452
      %vm455 = vcmask 261120
      %v456 = vsel %vm455, %v453, 0.0
      %v457 = vadd.f32 %v454, %v456
      %458 = vadd.xlane.f32.xlu0 %v457
      %v459 = vpop.xlane.xlu0 %458
      %v460 = vadd.f32 %v459, 0.0
      %v461 = vmul.f32 %v451, %v373
      %v462 = vmul.f32 %v452, %v375
      %v463 = vmul.f32 %v453, %v414
      %v464 = vadd.f32 %v461, %v462
      %v465 = vsel %vm455, %v463, 0.0
      %v466 = vadd.f32 %v464, %v465
      %467 = vadd.xlane.f32.xlu0 %v466
      %v468 = vpop.xlane.xlu0 %467
      %v469 = vadd.f32 %v468, 0.0
      %vm470 = vcmask 7168
      %471 = vst.msk [vmem:[%s208] sm:$0xff] %vm470, %v460
      %vm472 = vcmask 15368
      %473 = vst.msk [vmem:[%s208] sm:$0xff] %vm472, %v469
      %p474 = scmp.lt.s32.totalorder %s16, 1
      %s475 = scalar_select %p474, %s16, 1
      %s476 = smul.addr %s475, 3
      %s477 = smul.addr %s476, 4
      %s478 = scalar_lea.vmem %s3, %s477
      %p479 = scmp.lt.s32.totalorder %s16, 1
      %s480 = scalar_select %p479, %s16, 1
      %s481 = smul.addr %s480, 8
      %s482 = scalar_lea.vmem %s4, %s481
      // Predicated region
      $region33: #{basic_conv2d.1} parent=31 // pred_check
        %p483 = pneg %p102
      $region34: #{basic_conv2d.1} parent=31 // pred_check_branch
        %485 = sbr.rel (%p483) target = $region36
      $region35: #{basic_conv2d.1} parent=31 // pred_region
        _
      $region36: #{basic_conv2d.1} parent=31 // pred_fallthru
        _
      // Predicated region
      $region37: #{basic_conv2d.1} parent=31 // pred_check
        %p486 = pneg %p128
      $region38: #{basic_conv2d.1} parent=31 // pred_check_branch
        %488 = sbr.rel (%p486) target = $region40
      $region39: #{basic_conv2d.1} parent=31 // pred_region
        _
      $region40: #{basic_conv2d.1} parent=31 // pred_fallthru
        _
    $region32: #{basic_conv2d.1} parent=5 // pred_fallthru
      _
    %p489 = scmp.le.s32.totalorder 2, %s11
    // Predicated region
    $region41: #{basic_conv2d.1} parent=5 // pred_check
      %p490 = pneg %p489
    $region42: #{basic_conv2d.1} parent=5 // pred_check_branch
      %492 = sbr.rel (%p490) target = $region44
    $region43: #{basic_conv2d.1} parent=5 // pred_region
      %s493 = ssub.s32 %s11, 2
      // Predicated region
      $region45: #{basic_conv2d.1} parent=43 // pred_check
        %p494 = pneg %p108
      $region46: #{basic_conv2d.1} parent=43 // pred_check_branch
        %496 = sbr.rel (%p494) target = $region48
      $region47: #{basic_conv2d.1} parent=43 // pred_region
        %p497 = scmp.lt.s32.totalorder %s17, 1
        %s498 = scalar_select %p497, %s17, 1
        %s499 = smul.addr %s498, 3
        %s500 = smul.addr %s499, 4
        %s501 = scalar_lea.vmem %s3, %s500
      $region48: #{basic_conv2d.1} parent=43 // pred_fallthru
        _
      // Predicated region
      $region49: #{basic_conv2d.1} parent=43 // pred_check
        %p502 = pneg %p134
      $region50: #{basic_conv2d.1} parent=43 // pred_check_branch
        %504 = sbr.rel (%p502) target = $region52
      $region51: #{basic_conv2d.1} parent=43 // pred_region
        %p505 = scmp.lt.s32.totalorder %s17, 1
        %s506 = scalar_select %p505, %s17, 1
        %s507 = smul.addr %s506, 8
        %s508 = scalar_lea.vmem %s4, %s507
      $region52: #{basic_conv2d.1} parent=43 // pred_fallthru
        _
    $region44: #{basic_conv2d.1} parent=5 // pred_fallthru
      _
  $region6: #{basic_conv2d.1} parent=0 // loop_footer
    %s15 = sadd.s32 1, %s11
  $region7: #{basic_conv2d.1} parent=0 // loop_footer_branch
    %10 = sbr.rel target = $region3
  $region8: #{basic_conv2d.1} parent=0 // loop_exit
    _

</llo_original>
